<compile_context>
chip_gen: v7x
topology: tpu7x:2x2x1
jax: 0.10.0
libtpu: 0.0.40
codegen_flags: <defaults>
</compile_context>

<pallas_src>
import functools

import jax
import jax.numpy as jnp
from jax import lax
from jax.experimental import pallas as pl
from jax.experimental.pallas import tpu as pltpu

BN_EPS = 1e-5


# --------------------------- device introspection ---------------------------

def _tpu_generation():
    """Best-effort TPU generation (4/5/6/7); 0 if unknown."""
    try:
        kind = jax.devices()[0].device_kind.lower()
    except Exception:
        return 0
    if "v7" in kind or "7x" in kind:
        return 7
    if "v6" in kind:
        return 6
    if "v5" in kind:
        return 5
    if "v4" in kind:
        return 4
    return 0


# --------------------------------- kernel -----------------------------------

def lka_kernel(x_ref, w1_ref, w2_ref, wpw_ref, b_ref, o_ref, *, l_valid, cdt):
    """One block: (NB, C, Lp) slab of the native (N, C, L[p]) tensor.

    x_ref  : (NB, C, Lp) input dtype
    w1_ref : (C, 5)  cdt  depthwise taps, BN1 scale folded
    w2_ref : (C, 7)  cdt  depthwise dilated taps, BN2 scale folded
    wpw_ref: (C, C)  cdt  pointwise weights, BN3 scale folded
    b_ref  : (C, 5)  cdt  columns [b1, b2, b3, s4, b4]
    """
    xf = x_ref[...].astype(cdt)                      # (NB, C, Lp)
    w1 = w1_ref[...]
    w2 = w2_ref[...]
    wpw = wpw_ref[...]
    bias = b_ref[...]
    nb, _, lp = xf.shape

    lane = lax.broadcasted_iota(jnp.int32, (1, 1, lp), 2)
    zero = jnp.zeros((), cdt)

    def dw_conv(h, w, K, pad, dil):
        # Depthwise 'same' conv along lanes via XLU rolls.  Out-of-range taps
        # are zeroed by folding the boundary mask into the per-tap weight
        # (1, C, Lp) -> mask cost has no NB factor, multiply/add stay 2K-1
        # VPU ops per element.
        acc = None
        for k in range(K):                           # static unroll
            s = k * dil - pad                        # tap_k[i] = h[i + s]
            wk = w[:, k:k + 1][None]                 # (1, C, 1)
            if s == 0:
                wke = wk
                tap = h
            else:
                tap = pltpu.roll(h, shift=(-s) % lp, axis=2)   # XLU rotate
                valid = (lane < (l_valid - s)) if s > 0 else (lane >= -s)
                wke = jnp.where(valid, wk, zero)     # (1, C, Lp)
            term = wke * tap
            acc = term if acc is None else acc + term
        return acc

    b1 = bias[:, 0:1][None]                          # (1, C, 1)
    b2 = bias[:, 1:2][None]

    # conv1: depthwise k=5, pad=2 -> (+b1) -> ReLU
    h = jnp.maximum(dw_conv(xf, w1, 5, 2, 1) + b1, zero)
    # conv_spatial: depthwise k=7, pad=9, dilation=3 -> (+b2) -> ReLU
    h = jnp.maximum(dw_conv(h, w2, 7, 9, 3) + b2, zero)

    b3 = bias[:, 2:3]                                # (C, 1)
    s4 = bias[:, 3:4]
    b4 = bias[:, 4:5]

    # Pointwise 1x1 conv + gate, one MXU matmul per batch element in the
    # block (NB is small; MXU has enormous slack here).  This avoids any
    # transposes of the 3-D block.
    for b in range(nb):                              # static unroll (NB <= 16)
        hb = h[b]                                    # (C, Lp)
        y = jnp.dot(wpw, hb, preferred_element_type=jnp.float32).astype(cdt)
        y = jnp.maximum(y + b3, zero)                # BN3 shift + ReLU
        y = jnp.maximum(y * xf[b] * s4 + b4, zero)   # gate * identity, BN4, ReLU
        o_ref[b] = y.astype(o_ref.dtype)


# --------------------------------- wrapper ----------------------------------

def fold_bn(gamma, beta, mean, var, eps=BN_EPS):
    scale = gamma / jnp.sqrt(var + eps)
    shift = beta - mean * scale
    return scale, shift


def _pick_batch_tile(N, C, Lp, cap_bytes, max_nb=16):
    """Pick NB (batch elements per block): largest divisor of N whose f32
    block fits the cap, preferring >=4 grid steps (>=2 per v7x TensorCore)."""
    per_elem = C * Lp * 4                        # budget blocks in f32
    divs = [d for d in range(1, N + 1) if N % d == 0]
    fitting = [d for d in divs if d * per_elem <= cap_bytes and d <= max_nb]
    if not fitting:
        # TODO(synk): tile along L with a +/-11 element halo when a single
        # batch element's (C, Lp) slab already exceeds the VMEM budget.
        fitting = [1]
    for min_steps in (4, 2, 1):
        cands = [d for d in fitting if N // d >= min_steps]
        if cands:
            return max(cands)
    return max(fitting)


def lka_forward(x, w1, w2, wpw, bn_params):
    """x: (N, C, L). w1: (C,5) dw, w2: (C,7) dw (dil=3), wpw: (C,C) pointwise.
    bn_params: list of 4 (gamma, beta, mean, var) tuples (eval-mode BN)."""
    N, C, L = x.shape

    gen = _tpu_generation()
    use_bf16_vpu = gen >= 6                      # v6e/v7x: bf16 VPU 2x; v5e: f32 only
    cdt = jnp.bfloat16 if use_bf16_vpu else jnp.float32
    block_cap = (2 << 20) if gen >= 7 else (4 << 20)     # v7x has 64 MiB VMEM
    vmem_limit = (48 << 20) if gen >= 7 else (64 << 20)

    # One-time BN-scale folding into conv weights (tiny constant arrays).
    (s1, b1), (s2, b2), (s3, b3), (s4, b4) = [fold_bn(*p) for p in bn_params]
    f32 = jnp.float32
    w1f = (w1.astype(f32) * s1[:, None]).astype(cdt)          # (C, 5)
    w2f = (w2.astype(f32) * s2[:, None]).astype(cdt)          # (C, 7)
    wpwf = (wpw.astype(f32) * s3[:, None]).astype(cdt)        # (C, C)
    bias = jnp.stack([b1, b2, b3, s4, b4], axis=1).astype(cdt)  # (C, 5)

    # Lane-dense output: pad L up to a multiple of 128 only if needed.  The
    # boundary masks use the original L, so padding never changes the math.
    Lp = max(128, ((L + 127) // 128) * 128)
    x_in = x if Lp == L else jnp.pad(x, ((0, 0), (0, 0), (0, Lp - L)))

    nb = _pick_batch_tile(N, C, Lp, block_cap)
    grid = N // nb

    kern = functools.partial(lka_kernel, l_valid=L, cdt=cdt)
    out = pl.pallas_call(
        kern,
        out_shape=jax.ShapeDtypeStruct((N, C, Lp), x.dtype),
        grid_spec=pltpu.PrefetchScalarGridSpec(
            num_scalar_prefetch=0,
            grid=(grid,),
            in_specs=[
                pl.BlockSpec((nb, C, Lp), lambda j: (j, 0, 0)),   # x slab (native layout)
                pl.BlockSpec((C, 5), lambda j: (0, 0)),           # w1 (constant)
                pl.BlockSpec((C, 7), lambda j: (0, 0)),           # w2 (constant)
                pl.BlockSpec((C, C), lambda j: (0, 0)),           # wpw (constant)
                pl.BlockSpec((C, 5), lambda j: (0, 0)),           # bias/scale (constant)
            ],
            out_specs=pl.BlockSpec((nb, C, Lp), lambda j: (j, 0, 0)),
        ),
        compiler_params=pltpu.CompilerParams(
            dimension_semantics=("parallel",),
            vmem_limit_bytes=vmem_limit,
        ),
    )(x_in, w1f, w2f, wpwf, bias)

    if Lp != L:
        out = out[..., :L]
    return out


# ---------------------- parameter setup & JAX reference ----------------------

def make_params(key, C):
    ks = jax.random.split(key, 7)
    w1 = jax.random.normal(ks[0], (C, 5), jnp.float32) * 0.3    # depthwise (C,1,5)
    w2 = jax.random.normal(ks[1], (C, 7), jnp.float32) * 0.2    # depthwise (C,1,7)
    wpw = jax.random.normal(ks[2], (C, C), jnp.float32) * 0.3   # pointwise (C,C,1)

    def bn_raw(k):
        k0, k1, k2, k3 = jax.random.split(k, 4)
        gamma = 1.0 + 0.1 * jax.random.normal(k0, (C,), jnp.float32)
        beta = 0.1 * jax.random.normal(k1, (C,), jnp.float32)
        mean = 0.1 * jax.random.normal(k2, (C,), jnp.float32)
        var = 1.0 + 0.1 * jax.random.uniform(k3, (C,), jnp.float32)
        return gamma, beta, mean, var

    bns = [bn_raw(ks[3 + i]) for i in range(4)]
    return w1, w2, wpw, bns


def lka_ref(x, w1, w2, wpw, bns):
    """Pure-JAX reference mirroring the PyTorch forward (eval-mode BN, f32)."""
    C = x.shape[1]
    dn = ('NCH', 'OIH', 'NCH')

    def bn_relu(y, p):
        g, b, m, v = p
        y = (y - m[None, :, None]) / jnp.sqrt(v[None, :, None] + BN_EPS)
        y = y * g[None, :, None] + b[None, :, None]
        return jnp.maximum(y, 0.0)

    out = lax.conv_general_dilated(x, w1[:, None, :], (1,), [(2, 2)],
                                   dimension_numbers=dn, feature_group_count=C)
    out = bn_relu(out, bns[0])
    out = lax.conv_general_dilated(out, w2[:, None, :], (1,), [(9, 9)],
                                   rhs_dilation=(3,), dimension_numbers=dn,
                                   feature_group_count=C)
    out = bn_relu(out, bns[1])
    out = lax.conv_general_dilated(out, wpw[:, :, None], (1,), [(0, 0)],
                                   dimension_numbers=dn)
    out = bn_relu(out, bns[2])
    out = out * x
    out = bn_relu(out, bns[3])
    return out


if __name__ == "__main__":
    N, C, L = 4, 8, 256
    key = jax.random.PRNGKey(0)
    kx, kp = jax.random.split(key)
    x = jax.random.normal(kx, (N, C, L), jnp.float32)
    w1, w2, wpw, bns = make_params(kp, C)

    out = jax.block_until_ready(lka_forward(x, w1, w2, wpw, bns))
    ref = lka_ref(x, w1, w2, wpw, bns)

    max_ref = float(jnp.max(jnp.abs(ref)))
    max_diff = float(jnp.max(jnp.abs(out.astype(jnp.float32) - ref)))
    # bf16 elementwise path (v6e/v7x) accumulates the 5/7-tap depthwise sums in
    # bf16 -> ~1e-2-level relative deltas; f32 path (v5e/other) is tight.
    rel = 6e-2 if _tpu_generation() >= 6 else 2e-3
    tol = rel * (1.0 + max_ref)
    if max_diff > tol:
        raise RuntimeError(f"mismatch vs reference: max_diff={max_diff} tol={tol}")
    print("KERNEL_OK")
</pallas_src>

<mosaic_0001>
module attributes {stable_mosaic.version = 11 : i64} {
  func.func @lka_kernel(%arg0: i32, %arg1: memref<1x8x256xf32, #tpu.memory_space<vmem>>, %arg2: memref<8x5xf32, #tpu.memory_space<vmem>>, %arg3: memref<8x7xf32, #tpu.memory_space<vmem>>, %arg4: memref<8x8xf32, #tpu.memory_space<vmem>>, %arg5: memref<8x5xf32, #tpu.memory_space<vmem>>, %arg6: memref<1x8x256xf32, #tpu.memory_space<vmem>>) attributes {dimension_semantics = [#tpu.dimension_semantics<parallel>], iteration_bounds = array<i64: 4>, scalar_prefetch = 0 : i64, scratch_operands = 0 : i64, tpu.core_type = #tpu.core_type<tc>, window_params = [{transform_indices = @transform_0, window_bounds = array<i64: 1, 8, 256>}, {pipeline_mode = #tpu.pipeline_mode<synchronous>, transform_indices = @transform_1, window_bounds = array<i64: 8, 5>}, {pipeline_mode = #tpu.pipeline_mode<synchronous>, transform_indices = @transform_2, window_bounds = array<i64: 8, 7>}, {pipeline_mode = #tpu.pipeline_mode<synchronous>, transform_indices = @transform_3, window_bounds = array<i64: 8, 8>}, {pipeline_mode = #tpu.pipeline_mode<synchronous>, transform_indices = @transform_4, window_bounds = array<i64: 8, 5>}, {transform_indices = @transform_5, window_bounds = array<i64: 1, 8, 256>}]} {
    %c0 = arith.constant 0 : index
    %c0_0 = arith.constant 0 : index
    %c0_1 = arith.constant 0 : index
    %0 = vector.load %arg1[%c0, %c0_0, %c0_1] : memref<1x8x256xf32, #tpu.memory_space<vmem>>, vector<1x8x256xf32>
    %c0_2 = arith.constant 0 : index
    %c0_3 = arith.constant 0 : index
    %1 = vector.load %arg2[%c0_2, %c0_3] : memref<8x5xf32, #tpu.memory_space<vmem>>, vector<8x5xf32>
    %c0_4 = arith.constant 0 : index
    %c0_5 = arith.constant 0 : index
    %2 = vector.load %arg3[%c0_4, %c0_5] : memref<8x7xf32, #tpu.memory_space<vmem>>, vector<8x7xf32>
    %c0_6 = arith.constant 0 : index
    %c0_7 = arith.constant 0 : index
    %3 = vector.load %arg4[%c0_6, %c0_7] : memref<8x8xf32, #tpu.memory_space<vmem>>, vector<8x8xf32>
    %c0_8 = arith.constant 0 : index
    %c0_9 = arith.constant 0 : index
    %4 = vector.load %arg5[%c0_8, %c0_9] : memref<8x5xf32, #tpu.memory_space<vmem>>, vector<8x5xf32>
    %5 = tpu.iota {dimensions = array<i32: 2>} : vector<1x1x256xi32>
    %6 = vector.extract_strided_slice %4 {offsets = [0, 0], sizes = [8, 1], strides = [1, 1]} : vector<8x5xf32> to vector<8x1xf32>
    %7 = vector.shape_cast %6 : vector<8x1xf32> to vector<1x8x1xf32>
    %8 = vector.extract_strided_slice %4 {offsets = [0, 1], sizes = [8, 1], strides = [1, 1]} : vector<8x5xf32> to vector<8x1xf32>
    %9 = vector.shape_cast %8 : vector<8x1xf32> to vector<1x8x1xf32>
    %10 = vector.extract_strided_slice %1 {offsets = [0, 0], sizes = [8, 1], strides = [1, 1]} : vector<8x5xf32> to vector<8x1xf32>
    %11 = vector.shape_cast %10 : vector<8x1xf32> to vector<1x8x1xf32>
    %c2_i32 = arith.constant 2 : i32
    %12 = tpu.dynamic_rotate %0 by %c2_i32 dim 2 : vector<1x8x256xf32>, i32 -> vector<1x8x256xf32>
    %c2_i32_10 = arith.constant 2 : i32
    %13 = vector.broadcast %c2_i32_10 : i32 to vector<1x1x256xi32>
    %14 = arith.cmpi sge, %5, %13 : vector<1x1x256xi32>
    %cst = arith.constant 0.000000e+00 : f32
    %15 = vector.shape_cast %14 : vector<1x1x256xi1> to vector<1x1x256xi1>
    %16 = vector.broadcast %15 : vector<1x1x256xi1> to vector<1x8x256xi1>
    %17 = vector.shape_cast %11 : vector<1x8x1xf32> to vector<1x8x1xf32>
    %18 = vector.broadcast %17 : vector<1x8x1xf32> to vector<1x8x256xf32>
    %19 = vector.broadcast %cst : f32 to vector<1x8x256xf32>
    %20 = arith.select %16, %18, %19 : vector<1x8x256xi1>, vector<1x8x256xf32>
    %21 = arith.mulf %20, %12 : vector<1x8x256xf32>
    %22 = vector.extract_strided_slice %1 {offsets = [0, 1], sizes = [8, 1], strides = [1, 1]} : vector<8x5xf32> to vector<8x1xf32>
    %23 = vector.shape_cast %22 : vector<8x1xf32> to vector<1x8x1xf32>
    %c1_i32 = arith.constant 1 : i32
    %24 = tpu.dynamic_rotate %0 by %c1_i32 dim 2 : vector<1x8x256xf32>, i32 -> vector<1x8x256xf32>
    %c1_i32_11 = arith.constant 1 : i32
    %25 = vector.broadcast %c1_i32_11 : i32 to vector<1x1x256xi32>
    %26 = arith.cmpi sge, %5, %25 : vector<1x1x256xi32>
    %cst_12 = arith.constant 0.000000e+00 : f32
    %27 = vector.shape_cast %26 : vector<1x1x256xi1> to vector<1x1x256xi1>
    %28 = vector.broadcast %27 : vector<1x1x256xi1> to vector<1x8x256xi1>
    %29 = vector.shape_cast %23 : vector<1x8x1xf32> to vector<1x8x1xf32>
    %30 = vector.broadcast %29 : vector<1x8x1xf32> to vector<1x8x256xf32>
    %31 = vector.broadcast %cst_12 : f32 to vector<1x8x256xf32>
    %32 = arith.select %28, %30, %31 : vector<1x8x256xi1>, vector<1x8x256xf32>
    %33 = arith.mulf %32, %24 : vector<1x8x256xf32>
    %34 = arith.addf %21, %33 : vector<1x8x256xf32>
    %35 = vector.extract_strided_slice %1 {offsets = [0, 2], sizes = [8, 1], strides = [1, 1]} : vector<8x5xf32> to vector<8x1xf32>
    %36 = vector.shape_cast %35 : vector<8x1xf32> to vector<1x8x1xf32>
    %37 = vector.broadcast %36 : vector<1x8x1xf32> to vector<1x8x256xf32>
    %38 = arith.mulf %37, %0 : vector<1x8x256xf32>
    %39 = arith.addf %34, %38 : vector<1x8x256xf32>
    %40 = vector.extract_strided_slice %1 {offsets = [0, 3], sizes = [8, 1], strides = [1, 1]} : vector<8x5xf32> to vector<8x1xf32>
    %41 = vector.shape_cast %40 : vector<8x1xf32> to vector<1x8x1xf32>
    %c255_i32 = arith.constant 255 : i32
    %42 = tpu.dynamic_rotate %0 by %c255_i32 dim 2 : vector<1x8x256xf32>, i32 -> vector<1x8x256xf32>
    %c255_i32_13 = arith.constant 255 : i32
    %43 = vector.broadcast %c255_i32_13 : i32 to vector<1x1x256xi32>
    %44 = arith.cmpi slt, %5, %43 : vector<1x1x256xi32>
    %cst_14 = arith.constant 0.000000e+00 : f32
    %45 = vector.shape_cast %44 : vector<1x1x256xi1> to vector<1x1x256xi1>
    %46 = vector.broadcast %45 : vector<1x1x256xi1> to vector<1x8x256xi1>
    %47 = vector.shape_cast %41 : vector<1x8x1xf32> to vector<1x8x1xf32>
    %48 = vector.broadcast %47 : vector<1x8x1xf32> to vector<1x8x256xf32>
    %49 = vector.broadcast %cst_14 : f32 to vector<1x8x256xf32>
    %50 = arith.select %46, %48, %49 : vector<1x8x256xi1>, vector<1x8x256xf32>
    %51 = arith.mulf %50, %42 : vector<1x8x256xf32>
    %52 = arith.addf %39, %51 : vector<1x8x256xf32>
    %53 = vector.extract_strided_slice %1 {offsets = [0, 4], sizes = [8, 1], strides = [1, 1]} : vector<8x5xf32> to vector<8x1xf32>
    %54 = vector.shape_cast %53 : vector<8x1xf32> to vector<1x8x1xf32>
    %c254_i32 = arith.constant 254 : i32
    %55 = tpu.dynamic_rotate %0 by %c254_i32 dim 2 : vector<1x8x256xf32>, i32 -> vector<1x8x256xf32>
    %c254_i32_15 = arith.constant 254 : i32
    %56 = vector.broadcast %c254_i32_15 : i32 to vector<1x1x256xi32>
    %57 = arith.cmpi slt, %5, %56 : vector<1x1x256xi32>
    %cst_16 = arith.constant 0.000000e+00 : f32
    %58 = vector.shape_cast %57 : vector<1x1x256xi1> to vector<1x1x256xi1>
    %59 = vector.broadcast %58 : vector<1x1x256xi1> to vector<1x8x256xi1>
    %60 = vector.shape_cast %54 : vector<1x8x1xf32> to vector<1x8x1xf32>
    %61 = vector.broadcast %60 : vector<1x8x1xf32> to vector<1x8x256xf32>
    %62 = vector.broadcast %cst_16 : f32 to vector<1x8x256xf32>
    %63 = arith.select %59, %61, %62 : vector<1x8x256xi1>, vector<1x8x256xf32>
    %64 = arith.mulf %63, %55 : vector<1x8x256xf32>
    %65 = arith.addf %52, %64 : vector<1x8x256xf32>
    %66 = vector.broadcast %7 : vector<1x8x1xf32> to vector<1x8x256xf32>
    %67 = arith.addf %65, %66 : vector<1x8x256xf32>
    %cst_17 = arith.constant 0.000000e+00 : f32
    %68 = vector.broadcast %cst_17 : f32 to vector<1x8x256xf32>
    %69 = arith.maximumf %67, %68 : vector<1x8x256xf32>
    %70 = vector.extract_strided_slice %2 {offsets = [0, 0], sizes = [8, 1], strides = [1, 1]} : vector<8x7xf32> to vector<8x1xf32>
    %71 = vector.shape_cast %70 : vector<8x1xf32> to vector<1x8x1xf32>
    %c9_i32 = arith.constant 9 : i32
    %72 = tpu.dynamic_rotate %69 by %c9_i32 dim 2 : vector<1x8x256xf32>, i32 -> vector<1x8x256xf32>
    %c9_i32_18 = arith.constant 9 : i32
    %73 = vector.broadcast %c9_i32_18 : i32 to vector<1x1x256xi32>
    %74 = arith.cmpi sge, %5, %73 : vector<1x1x256xi32>
    %cst_19 = arith.constant 0.000000e+00 : f32
    %75 = vector.shape_cast %74 : vector<1x1x256xi1> to vector<1x1x256xi1>
    %76 = vector.broadcast %75 : vector<1x1x256xi1> to vector<1x8x256xi1>
    %77 = vector.shape_cast %71 : vector<1x8x1xf32> to vector<1x8x1xf32>
    %78 = vector.broadcast %77 : vector<1x8x1xf32> to vector<1x8x256xf32>
    %79 = vector.broadcast %cst_19 : f32 to vector<1x8x256xf32>
    %80 = arith.select %76, %78, %79 : vector<1x8x256xi1>, vector<1x8x256xf32>
    %81 = arith.mulf %80, %72 : vector<1x8x256xf32>
    %82 = vector.extract_strided_slice %2 {offsets = [0, 1], sizes = [8, 1], strides = [1, 1]} : vector<8x7xf32> to vector<8x1xf32>
    %83 = vector.shape_cast %82 : vector<8x1xf32> to vector<1x8x1xf32>
    %c6_i32 = arith.constant 6 : i32
    %84 = tpu.dynamic_rotate %69 by %c6_i32 dim 2 : vector<1x8x256xf32>, i32 -> vector<1x8x256xf32>
    %c6_i32_20 = arith.constant 6 : i32
    %85 = vector.broadcast %c6_i32_20 : i32 to vector<1x1x256xi32>
    %86 = arith.cmpi sge, %5, %85 : vector<1x1x256xi32>
    %cst_21 = arith.constant 0.000000e+00 : f32
    %87 = vector.shape_cast %86 : vector<1x1x256xi1> to vector<1x1x256xi1>
    %88 = vector.broadcast %87 : vector<1x1x256xi1> to vector<1x8x256xi1>
    %89 = vector.shape_cast %83 : vector<1x8x1xf32> to vector<1x8x1xf32>
    %90 = vector.broadcast %89 : vector<1x8x1xf32> to vector<1x8x256xf32>
    %91 = vector.broadcast %cst_21 : f32 to vector<1x8x256xf32>
    %92 = arith.select %88, %90, %91 : vector<1x8x256xi1>, vector<1x8x256xf32>
    %93 = arith.mulf %92, %84 : vector<1x8x256xf32>
    %94 = arith.addf %81, %93 : vector<1x8x256xf32>
    %95 = vector.extract_strided_slice %2 {offsets = [0, 2], sizes = [8, 1], strides = [1, 1]} : vector<8x7xf32> to vector<8x1xf32>
    %96 = vector.shape_cast %95 : vector<8x1xf32> to vector<1x8x1xf32>
    %c3_i32 = arith.constant 3 : i32
    %97 = tpu.dynamic_rotate %69 by %c3_i32 dim 2 : vector<1x8x256xf32>, i32 -> vector<1x8x256xf32>
    %c3_i32_22 = arith.constant 3 : i32
    %98 = vector.broadcast %c3_i32_22 : i32 to vector<1x1x256xi32>
    %99 = arith.cmpi sge, %5, %98 : vector<1x1x256xi32>
    %cst_23 = arith.constant 0.000000e+00 : f32
    %100 = vector.shape_cast %99 : vector<1x1x256xi1> to vector<1x1x256xi1>
    %101 = vector.broadcast %100 : vector<1x1x256xi1> to vector<1x8x256xi1>
    %102 = vector.shape_cast %96 : vector<1x8x1xf32> to vector<1x8x1xf32>
    %103 = vector.broadcast %102 : vector<1x8x1xf32> to vector<1x8x256xf32>
    %104 = vector.broadcast %cst_23 : f32 to vector<1x8x256xf32>
    %105 = arith.select %101, %103, %104 : vector<1x8x256xi1>, vector<1x8x256xf32>
    %106 = arith.mulf %105, %97 : vector<1x8x256xf32>
    %107 = arith.addf %94, %106 : vector<1x8x256xf32>
    %108 = vector.extract_strided_slice %2 {offsets = [0, 3], sizes = [8, 1], strides = [1, 1]} : vector<8x7xf32> to vector<8x1xf32>
    %109 = vector.shape_cast %108 : vector<8x1xf32> to vector<1x8x1xf32>
    %110 = vector.broadcast %109 : vector<1x8x1xf32> to vector<1x8x256xf32>
    %111 = arith.mulf %110, %69 : vector<1x8x256xf32>
    %112 = arith.addf %107, %111 : vector<1x8x256xf32>
    %113 = vector.extract_strided_slice %2 {offsets = [0, 4], sizes = [8, 1], strides = [1, 1]} : vector<8x7xf32> to vector<8x1xf32>
    %114 = vector.shape_cast %113 : vector<8x1xf32> to vector<1x8x1xf32>
    %c253_i32 = arith.constant 253 : i32
    %115 = tpu.dynamic_rotate %69 by %c253_i32 dim 2 : vector<1x8x256xf32>, i32 -> vector<1x8x256xf32>
    %c253_i32_24 = arith.constant 253 : i32
    %116 = vector.broadcast %c253_i32_24 : i32 to vector<1x1x256xi32>
    %117 = arith.cmpi slt, %5, %116 : vector<1x1x256xi32>
    %cst_25 = arith.constant 0.000000e+00 : f32
    %118 = vector.shape_cast %117 : vector<1x1x256xi1> to vector<1x1x256xi1>
    %119 = vector.broadcast %118 : vector<1x1x256xi1> to vector<1x8x256xi1>
    %120 = vector.shape_cast %114 : vector<1x8x1xf32> to vector<1x8x1xf32>
    %121 = vector.broadcast %120 : vector<1x8x1xf32> to vector<1x8x256xf32>
    %122 = vector.broadcast %cst_25 : f32 to vector<1x8x256xf32>
    %123 = arith.select %119, %121, %122 : vector<1x8x256xi1>, vector<1x8x256xf32>
    %124 = arith.mulf %123, %115 : vector<1x8x256xf32>
    %125 = arith.addf %112, %124 : vector<1x8x256xf32>
    %126 = vector.extract_strided_slice %2 {offsets = [0, 5], sizes = [8, 1], strides = [1, 1]} : vector<8x7xf32> to vector<8x1xf32>
    %127 = vector.shape_cast %126 : vector<8x1xf32> to vector<1x8x1xf32>
    %c250_i32 = arith.constant 250 : i32
    %128 = tpu.dynamic_rotate %69 by %c250_i32 dim 2 : vector<1x8x256xf32>, i32 -> vector<1x8x256xf32>
    %c250_i32_26 = arith.constant 250 : i32
    %129 = vector.broadcast %c250_i32_26 : i32 to vector<1x1x256xi32>
    %130 = arith.cmpi slt, %5, %129 : vector<1x1x256xi32>
    %cst_27 = arith.constant 0.000000e+00 : f32
    %131 = vector.shape_cast %130 : vector<1x1x256xi1> to vector<1x1x256xi1>
    %132 = vector.broadcast %131 : vector<1x1x256xi1> to vector<1x8x256xi1>
    %133 = vector.shape_cast %127 : vector<1x8x1xf32> to vector<1x8x1xf32>
    %134 = vector.broadcast %133 : vector<1x8x1xf32> to vector<1x8x256xf32>
    %135 = vector.broadcast %cst_27 : f32 to vector<1x8x256xf32>
    %136 = arith.select %132, %134, %135 : vector<1x8x256xi1>, vector<1x8x256xf32>
    %137 = arith.mulf %136, %128 : vector<1x8x256xf32>
    %138 = arith.addf %125, %137 : vector<1x8x256xf32>
    %139 = vector.extract_strided_slice %2 {offsets = [0, 6], sizes = [8, 1], strides = [1, 1]} : vector<8x7xf32> to vector<8x1xf32>
    %140 = vector.shape_cast %139 : vector<8x1xf32> to vector<1x8x1xf32>
    %c247_i32 = arith.constant 247 : i32
    %141 = tpu.dynamic_rotate %69 by %c247_i32 dim 2 : vector<1x8x256xf32>, i32 -> vector<1x8x256xf32>
    %c247_i32_28 = arith.constant 247 : i32
    %142 = vector.broadcast %c247_i32_28 : i32 to vector<1x1x256xi32>
    %143 = arith.cmpi slt, %5, %142 : vector<1x1x256xi32>
    %cst_29 = arith.constant 0.000000e+00 : f32
    %144 = vector.shape_cast %143 : vector<1x1x256xi1> to vector<1x1x256xi1>
    %145 = vector.broadcast %144 : vector<1x1x256xi1> to vector<1x8x256xi1>
    %146 = vector.shape_cast %140 : vector<1x8x1xf32> to vector<1x8x1xf32>
    %147 = vector.broadcast %146 : vector<1x8x1xf32> to vector<1x8x256xf32>
    %148 = vector.broadcast %cst_29 : f32 to vector<1x8x256xf32>
    %149 = arith.select %145, %147, %148 : vector<1x8x256xi1>, vector<1x8x256xf32>
    %150 = arith.mulf %149, %141 : vector<1x8x256xf32>
    %151 = arith.addf %138, %150 : vector<1x8x256xf32>
    %152 = vector.broadcast %9 : vector<1x8x1xf32> to vector<1x8x256xf32>
    %153 = arith.addf %151, %152 : vector<1x8x256xf32>
    %cst_30 = arith.constant 0.000000e+00 : f32
    %154 = vector.broadcast %cst_30 : f32 to vector<1x8x256xf32>
    %155 = arith.maximumf %153, %154 : vector<1x8x256xf32>
    %156 = vector.extract_strided_slice %4 {offsets = [0, 2], sizes = [8, 1], strides = [1, 1]} : vector<8x5xf32> to vector<8x1xf32>
    %157 = vector.extract_strided_slice %4 {offsets = [0, 3], sizes = [8, 1], strides = [1, 1]} : vector<8x5xf32> to vector<8x1xf32>
    %158 = vector.extract_strided_slice %4 {offsets = [0, 4], sizes = [8, 1], strides = [1, 1]} : vector<8x5xf32> to vector<8x1xf32>
    %159 = vector.shape_cast %155 : vector<1x8x256xf32> to vector<8x256xf32>
    %cst_31 = arith.constant dense<0.000000e+00> : vector<8x256xf32>
    %160 = tpu.matmul %3, %159, %cst_31 {dimension_numbers = #tpu.dot_dimension_numbers<[1], [0], [0], [1], [0, 0, 1, 1], [], []>} : vector<8x8xf32>, vector<8x256xf32>, vector<8x256xf32> -> vector<8x256xf32>
    %161 = vector.broadcast %156 : vector<8x1xf32> to vector<8x256xf32>
    %162 = arith.addf %160, %161 : vector<8x256xf32>
    %cst_32 = arith.constant 0.000000e+00 : f32
    %163 = vector.broadcast %cst_32 : f32 to vector<8x256xf32>
    %164 = arith.maximumf %162, %163 : vector<8x256xf32>
    %165 = vector.shape_cast %0 : vector<1x8x256xf32> to vector<8x256xf32>
    %166 = arith.mulf %164, %165 : vector<8x256xf32>
    %167 = vector.broadcast %157 : vector<8x1xf32> to vector<8x256xf32>
    %168 = arith.mulf %166, %167 : vector<8x256xf32>
    %169 = vector.broadcast %158 : vector<8x1xf32> to vector<8x256xf32>
    %170 = arith.addf %168, %169 : vector<8x256xf32>
    %cst_33 = arith.constant 0.000000e+00 : f32
    %171 = vector.broadcast %cst_33 : f32 to vector<8x256xf32>
    %172 = arith.maximumf %170, %171 : vector<8x256xf32>
    %c0_34 = arith.constant 0 : index
    %c0_35 = arith.constant 0 : index
    %c0_36 = arith.constant 0 : index
    %173 = vector.load %arg6[%c0_34, %c0_35, %c0_36] : memref<1x8x256xf32, #tpu.memory_space<vmem>>, vector<1x8x256xf32>
    %174 = vector.shape_cast %173 : vector<1x8x256xf32> to vector<8x256xf32>
    %175 = vector.shape_cast %172 : vector<8x256xf32> to vector<1x8x256xf32>
    tpu.vector_store %arg6[%c0_34, %c0_35, %c0_36], %175 {strides = array<i32>} : memref<1x8x256xf32, #tpu.memory_space<vmem>>, vector<1x8x256xf32>,
    return
  }
  func.func @transform_0(%arg0: i32) -> (i32, i32, i32) {
    %c0_i32 = arith.constant 0 : i32
    %c0_i32_0 = arith.constant 0 : i32
    %c0_i32_1 = arith.constant 0 : i32
    return %arg0, %c0_i32, %c0_i32_0 : i32, i32, i32
  }
  func.func @transform_1(%arg0: i32) -> (i32, i32) {
    %c0_i32 = arith.constant 0 : i32
    %c0_i32_0 = arith.constant 0 : i32
    %c0_i32_1 = arith.constant 0 : i32
    return %c0_i32, %c0_i32_0 : i32, i32
  }
  func.func @transform_2(%arg0: i32) -> (i32, i32) {
    %c0_i32 = arith.constant 0 : i32
    %c0_i32_0 = arith.constant 0 : i32
    %c0_i32_1 = arith.constant 0 : i32
    return %c0_i32, %c0_i32_0 : i32, i32
  }
  func.func @transform_3(%arg0: i32) -> (i32, i32) {
    %c0_i32 = arith.constant 0 : i32
    %c0_i32_0 = arith.constant 0 : i32
    %c0_i32_1 = arith.constant 0 : i32
    return %c0_i32, %c0_i32_0 : i32, i32
  }
  func.func @transform_4(%arg0: i32) -> (i32, i32) {
    %c0_i32 = arith.constant 0 : i32
    %c0_i32_0 = arith.constant 0 : i32
    %c0_i32_1 = arith.constant 0 : i32
    return %c0_i32, %c0_i32_0 : i32, i32
  }
  func.func @transform_5(%arg0: i32) -> (i32, i32, i32) {
    %c0_i32 = arith.constant 0 : i32
    %c0_i32_0 = arith.constant 0 : i32
    %c0_i32_1 = arith.constant 0 : i32
    return %arg0, %c0_i32, %c0_i32_0 : i32, i32, i32
  }
}

</mosaic_0001>

<llo_original>
// kernel: tpu_custom_call.1
$region0: #{tpu_custom_call.1}
  #allocation0 [shape = 'u32[]', space=smem, size = 0x4, offset = 0x4, fixed_abs, tag = 'smem constant byte address 0x4 - core index']
  #allocation1 [shape = 'u32[144,128]{1,0:T(1,128)}', space=vmem, size = 0x12000, scoped, tag = 'internal scratch']
  %s0 = inlined_call_operand.hbm [shape: f32[4,8,256], index: 0, kind: input, shape index: {}]
  %s1 = inlined_call_operand.hbm [shape: f32[8,5], index: 1, kind: input, shape index: {}]
  %s2 = inlined_call_operand.hbm [shape: f32[8,7], index: 2, kind: input, shape index: {}]
  %s3 = inlined_call_operand.hbm [shape: f32[8,8], index: 3, kind: input, shape index: {}]
  %s4 = inlined_call_operand.hbm [shape: f32[8,5], index: 4, kind: input, shape index: {}]
  %s5 = inlined_call_operand.hbm [shape: f32[4,8,256], index: 5, kind: output, shape index: {}]
  %s6 = sld [smem:[#allocation0]]
  $region73: #{tpu_custom_call.1} parent=0
    _
  %s8 = ssub.s32 1, %s6
  %s9 = scalar_select 0, %s8, %s6
  $region1: #{tpu_custom_call.1} parent=0
    #allocation2 [shape = 'u8[16384]{0}', space=vmem, size = 0x4000, scoped, tag = 'input window, operand 0']
    #allocation3 [shape = 's32[2]{0}', space=sflag, size = 0x8, scoped, tag = 'scoped memory for tpu_custom_call.1']
    #allocation4 [shape = 's32[2]{0}', space=sflag, size = 0x8, scoped, tag = 'scoped memory for tpu_custom_call.1']
    #allocation5 [shape = 'u8[4096]{0}', space=vmem, size = 0x1000, scoped, tag = 'input window, operand 1, single buffered']
    #allocation6 [shape = 's32[1]{0}', space=sflag, size = 0x4, scoped, tag = 'scoped memory for tpu_custom_call.1']
    #allocation7 [shape = 'u8[4096]{0}', space=vmem, size = 0x1000, scoped, tag = 'input window, operand 2, single buffered']
    #allocation8 [shape = 'u8[4096]{0}', space=vmem, size = 0x1000, scoped, tag = 'input window, operand 3, single buffered']
    #allocation9 [shape = 's32[1]{0}', space=sflag, size = 0x4, scoped, tag = 'scoped memory for tpu_custom_call.1']
    #allocation10 [shape = 'u8[4096]{0}', space=vmem, size = 0x1000, scoped, tag = 'input window, operand 4, single buffered']
    #allocation11 [shape = 'u8[16384]{0}', space=vmem, size = 0x4000, scoped, tag = 'output window, operand 0']
    %10 = vsyncpa [#allocation3], 0
    %s11 = scalar_lea.sflag [#allocation3], 1
    %12 = vsyncpa %s11, 0
    %13 = vsyncpa [#allocation6], 0
    %14 = vsyncpa [#allocation9], 0
    %15 = vsyncpa [#allocation4], 0
    %s16 = scalar_lea.sflag [#allocation4], 1
    %17 = vsyncpa %s16, 0
    loop: start=0, step=1, limit=6
    $region2: #{tpu_custom_call.1} parent=1 // loop_pre_header
      _
    $region3: #{tpu_custom_call.1} parent=1 // loop_header
      %s19 = sphi 0, %s23
      %p20 = scmp.ge.s32.totalorder %s19, 6
      %s29 = sphi 0, %s31
      %s32 = sphi 0, %s29
      %s33 = sphi 0, %s32
      %s49 = sphi 0, %s33
      %s53 = sphi 0, %s53
      %s55 = sphi 0, %s53
      %s56 = sphi 0, %s55
      %s70 = sphi 0, %s56
      %s74 = sphi 0, %s74
      %s76 = sphi 0, %s74
      %s77 = sphi 0, %s76
      %s91 = sphi 0, %s77
      %s95 = sphi 0, %s95
      %s97 = sphi 0, %s95
      %s98 = sphi 0, %s97
      %s112 = sphi 0, %s98
      %s116 = sphi 0, %s116
      %s118 = sphi 0, %s116
      %s119 = sphi 0, %s118
      %s133 = sphi 0, %s119
      %s139 = sphi 0, %s141
      %s142 = sphi 0, %s139
      %s143 = sphi 0, %s142
      %s159 = sphi 0, %s143
    $region4: #{tpu_custom_call.1} parent=1 // loop_header_branch
      %22 = sbr.rel (%p20) target = $region8
    $region5: #{tpu_custom_call.1} parent=1 // loop_body
      %s24 = ssub.s32 %s19, 1
      %s25 = ssub.s32 %s19, 2
      %s26 = sadd.s32 %s19, 1
      %s27 = ssub.s32 %s19, %s26
      %p28 = scmp.eq.s32.totalorder %s27, 0
      %s30 = sadd.s32 %s29, 1
      %s31 = scalar_select %p28, %s29, %s30
      %p34 = pneg %p28
      %p35 = scmp.eq.s32.totalorder %s19, 3
      %p36 = por %p34, %p35
      %p37 = scmp.ne.s32.totalorder %s29, %s32
      %p38 = scmp.eq.s32.totalorder %s19, 0
      %p39 = por %p37, %p38
      %p40 = scmp.ne.s32.totalorder %s29, %s32
      %p41 = scmp.eq.s32.totalorder %s24, 3
      %p42 = por %p40, %p41
      %p43 = scmp.ne.s32.totalorder %s32, %s33
      %p44 = scmp.eq.s32.totalorder %s24, 0
      %p45 = por %p43, %p44
      %p46 = scmp.ne.s32.totalorder %s32, %s33
      %p47 = scmp.eq.s32.totalorder %s25, 3
      %p48 = por %p46, %p47
      %p50 = scmp.ne.s32.totalorder %s33, %s49
      %p51 = scmp.eq.s32.totalorder %s25, 0
      %p52 = por %p50, %p51
      %s54 = sadd.s32 %s53, 1
      %p57 = scmp.eq.s32.totalorder %s19, 3
      %p58 = scmp.ne.s32.totalorder %s53, %s55
      %p59 = scmp.eq.s32.totalorder %s19, 0
      %p60 = por %p58, %p59
      %p61 = scmp.ne.s32.totalorder %s53, %s55
      %p62 = scmp.eq.s32.totalorder %s24, 3
      %p63 = por %p61, %p62
      %p64 = scmp.ne.s32.totalorder %s55, %s56
      %p65 = scmp.eq.s32.totalorder %s24, 0
      %p66 = por %p64, %p65
      %p67 = scmp.ne.s32.totalorder %s55, %s56
      %p68 = scmp.eq.s32.totalorder %s25, 3
      %p69 = por %p67, %p68
      %p71 = scmp.ne.s32.totalorder %s56, %s70
      %p72 = scmp.eq.s32.totalorder %s25, 0
      %p73 = por %p71, %p72
      %s75 = sadd.s32 %s74, 1
      %p78 = scmp.eq.s32.totalorder %s19, 3
      %p79 = scmp.ne.s32.totalorder %s74, %s76
      %p80 = scmp.eq.s32.totalorder %s19, 0
      %p81 = por %p79, %p80
      %p82 = scmp.ne.s32.totalorder %s74, %s76
      %p83 = scmp.eq.s32.totalorder %s24, 3
      %p84 = por %p82, %p83
      %p85 = scmp.ne.s32.totalorder %s76, %s77
      %p86 = scmp.eq.s32.totalorder %s24, 0
      %p87 = por %p85, %p86
      %p88 = scmp.ne.s32.totalorder %s76, %s77
      %p89 = scmp.eq.s32.totalorder %s25, 3
      %p90 = por %p88, %p89
      %p92 = scmp.ne.s32.totalorder %s77, %s91
      %p93 = scmp.eq.s32.totalorder %s25, 0
      %p94 = por %p92, %p93
      %s96 = sadd.s32 %s95, 1
      %p99 = scmp.eq.s32.totalorder %s19, 3
      %p100 = scmp.ne.s32.totalorder %s95, %s97
      %p101 = scmp.eq.s32.totalorder %s19, 0
      %p102 = por %p100, %p101
      %p103 = scmp.ne.s32.totalorder %s95, %s97
      %p104 = scmp.eq.s32.totalorder %s24, 3
      %p105 = por %p103, %p104
      %p106 = scmp.ne.s32.totalorder %s97, %s98
      %p107 = scmp.eq.s32.totalorder %s24, 0
      %p108 = por %p106, %p107
      %p109 = scmp.ne.s32.totalorder %s97, %s98
      %p110 = scmp.eq.s32.totalorder %s25, 3
      %p111 = por %p109, %p110
      %p113 = scmp.ne.s32.totalorder %s98, %s112
      %p114 = scmp.eq.s32.totalorder %s25, 0
      %p115 = por %p113, %p114
      %s117 = sadd.s32 %s116, 1
      %p120 = scmp.eq.s32.totalorder %s19, 3
      %p121 = scmp.ne.s32.totalorder %s116, %s118
      %p122 = scmp.eq.s32.totalorder %s19, 0
      %p123 = por %p121, %p122
      %p124 = scmp.ne.s32.totalorder %s116, %s118
      %p125 = scmp.eq.s32.totalorder %s24, 3
      %p126 = por %p124, %p125
      %p127 = scmp.ne.s32.totalorder %s118, %s119
      %p128 = scmp.eq.s32.totalorder %s24, 0
      %p129 = por %p127, %p128
      %p130 = scmp.ne.s32.totalorder %s118, %s119
      %p131 = scmp.eq.s32.totalorder %s25, 3
      %p132 = por %p130, %p131
      %p134 = scmp.ne.s32.totalorder %s119, %s133
      %p135 = scmp.eq.s32.totalorder %s25, 0
      %p136 = por %p134, %p135
      %s137 = ssub.s32 %s19, %s26
      %p138 = scmp.eq.s32.totalorder %s137, 0
      %s140 = sadd.s32 %s139, 1
      %s141 = scalar_select %p138, %s139, %s140
      %p144 = pneg %p138
      %p145 = scmp.eq.s32.totalorder %s19, 3
      %p146 = por %p144, %p145
      %p147 = scmp.ne.s32.totalorder %s139, %s142
      %p148 = scmp.eq.s32.totalorder %s19, 0
      %p149 = por %p147, %p148
      %p150 = scmp.ne.s32.totalorder %s139, %s142
      %p151 = scmp.eq.s32.totalorder %s24, 3
      %p152 = por %p150, %p151
      %p153 = scmp.ne.s32.totalorder %s142, %s143
      %p154 = scmp.eq.s32.totalorder %s24, 0
      %p155 = por %p153, %p154
      %p156 = scmp.ne.s32.totalorder %s142, %s143
      %p157 = scmp.eq.s32.totalorder %s25, 3
      %p158 = por %p156, %p157
      %p160 = scmp.ne.s32.totalorder %s143, %s159
      %p161 = scmp.eq.s32.totalorder %s25, 0
      %p162 = por %p160, %p161
      %p163 = scmp.le.s32.totalorder 1, %s19
      %p164 = scmp.lt.s32.totalorder %s19, 5
      %p165 = pnand %p163, %p164
      %p166 = pneg %p165
      // Predicated region
      $region9: #{tpu_custom_call.1} parent=5 // pred_check
        _
      $region10: #{tpu_custom_call.1} parent=5 // pred_check_branch
        %168 = sbr.rel (%p165) target = $region12
      $region11: #{tpu_custom_call.1} parent=5 // pred_region
        %s169 = ssub.s32 %s19, 1
        // Predicated region
        $region13: #{tpu_custom_call.1} parent=11 // pred_check
          %p170 = pneg %p66
        $region14: #{tpu_custom_call.1} parent=11 // pred_check_branch
          %172 = sbr.rel (%p170) target = $region16
        $region15: #{tpu_custom_call.1} parent=11 // pred_region
          %s174 = ssub.s32 128, 128
          %175 = vsyncadd [#allocation6], %s174
          %s177 = sshll.u32 [#allocation5], 4
          %s178 = int_to_ptr.vmem [resolvable:$true] %s177
          %180 = dma.hbm_to_vmem [thread:$0]  %s1, 128, %s178, [#allocation6]
        $region16: #{tpu_custom_call.1} parent=11 // pred_fallthru
          _
        // Predicated region
        $region17: #{tpu_custom_call.1} parent=11 // pred_check
          %p181 = pneg %p87
        $region18: #{tpu_custom_call.1} parent=11 // pred_check_branch
          %183 = sbr.rel (%p181) target = $region20
        $region19: #{tpu_custom_call.1} parent=11 // pred_region
          %s185 = ssub.s32 128, 128
          %186 = vsyncadd [#allocation6], %s185
          %s188 = sshll.u32 [#allocation7], 4
          %s189 = int_to_ptr.vmem [resolvable:$true] %s188
          %191 = dma.hbm_to_vmem [thread:$0]  %s2, 128, %s189, [#allocation6]
        $region20: #{tpu_custom_call.1} parent=11 // pred_fallthru
          _
        // Predicated region
        $region21: #{tpu_custom_call.1} parent=11 // pred_check
          %p192 = pneg %p108
        $region22: #{tpu_custom_call.1} parent=11 // pred_check_branch
          %194 = sbr.rel (%p192) target = $region24
        $region23: #{tpu_custom_call.1} parent=11 // pred_region
          %s196 = ssub.s32 128, 128
          %197 = vsyncadd [#allocation9], %s196
          %s199 = sshll.u32 [#allocation8], 4
          %s200 = int_to_ptr.vmem [resolvable:$true] %s199
          %202 = dma.hbm_to_vmem [thread:$0]  %s3, 128, %s200, [#allocation9]
        $region24: #{tpu_custom_call.1} parent=11 // pred_fallthru
          _
        // Predicated region
        $region25: #{tpu_custom_call.1} parent=11 // pred_check
          %p203 = pneg %p129
        $region26: #{tpu_custom_call.1} parent=11 // pred_check_branch
          %205 = sbr.rel (%p203) target = $region28
        $region27: #{tpu_custom_call.1} parent=11 // pred_region
          %s207 = ssub.s32 128, 128
          %208 = vsyncadd [#allocation9], %s207
          %s210 = sshll.u32 [#allocation10], 4
          %s211 = int_to_ptr.vmem [resolvable:$true] %s210
          %213 = dma.hbm_to_vmem [thread:$0]  %s4, 128, %s211, [#allocation9]
        $region28: #{tpu_custom_call.1} parent=11 // pred_fallthru
          _
      $region12: #{tpu_custom_call.1} parent=5 // pred_fallthru
        _
      %p214 = scmp.lt.s32.totalorder %s19, 4
      // Predicated region
      $region29: #{tpu_custom_call.1} parent=5 // pred_check
        %p215 = pneg %p214
      $region30: #{tpu_custom_call.1} parent=5 // pred_check_branch
        %217 = sbr.rel (%p215) target = $region32
      $region31: #{tpu_custom_call.1} parent=5 // pred_region
        // Predicated region
        $region33: #{tpu_custom_call.1} parent=31 // pred_check
          %p218 = pneg %p39
        $region34: #{tpu_custom_call.1} parent=31 // pred_check_branch
          %220 = sbr.rel (%p218) target = $region36
        $region35: #{tpu_custom_call.1} parent=31 // pred_region
          %s221 = sand.u32 %s29, 1
          %s222 = scalar_lea.sflag [#allocation3], %s221
          %s223 = sand.u32 %s29, 1
          %s224 = smul.addr %s223, 16
          %s225 = scalar_lea.vmem [#allocation2], %s224
          %s227 = ssub.s32 256, 256
          %228 = vsyncadd %s222, %s227
          %s229 = smul.addr %s19, 2
          %s230 = smul.addr %s229, 128
          %s231 = scalar_lea.hbm %s0, %s230
          %s233 = sshll.u32 %s225, 4
          %s234 = int_to_ptr.vmem [resolvable:$true] %s233
          %236 = dma.hbm_to_vmem [thread:$0]  %s231, 256, %s234, %s222
        $region36: #{tpu_custom_call.1} parent=31 // pred_fallthru
          _
      $region32: #{tpu_custom_call.1} parent=5 // pred_fallthru
        _
      %p237 = scmp.le.s32.totalorder 1, %s19
      %p238 = scmp.lt.s32.totalorder %s19, 5
      %p239 = pnand %p237, %p238
      %p240 = pneg %p239
      // Predicated region
      $region37: #{tpu_custom_call.1} parent=5 // pred_check
        _
      $region38: #{tpu_custom_call.1} parent=5 // pred_check_branch
        %242 = sbr.rel (%p239) target = $region40
      $region39: #{tpu_custom_call.1} parent=5 // pred_region
        %s243 = ssub.s32 %s19, 1
        %s244 = sand.u32 %s32, 1
        %s245 = scalar_lea.sflag [#allocation3], %s244
        %s246 = sand.u32 %s32, 1
        %s247 = smul.addr %s246, 16
        %s248 = scalar_lea.vmem [#allocation2], %s247
        // Predicated region
        $region41: #{tpu_custom_call.1} parent=39 // pred_check
          %p249 = pneg %p45
        $region42: #{tpu_custom_call.1} parent=39 // pred_check_branch
          %251 = sbr.rel (%p249) target = $region44
        $region43: #{tpu_custom_call.1} parent=39 // pred_region
          %252 = dma.done %s245, 256
        $region44: #{tpu_custom_call.1} parent=39 // pred_fallthru
          _
        // Predicated region
        $region45: #{tpu_custom_call.1} parent=39 // pred_check
          %p253 = pneg %p66
        $region46: #{tpu_custom_call.1} parent=39 // pred_check_branch
          %255 = sbr.rel (%p253) target = $region48
        $region47: #{tpu_custom_call.1} parent=39 // pred_region
          %256 = dma.done [#allocation6], 128
        $region48: #{tpu_custom_call.1} parent=39 // pred_fallthru
          _
        // Predicated region
        $region49: #{tpu_custom_call.1} parent=39 // pred_check
          %p257 = pneg %p87
        $region50: #{tpu_custom_call.1} parent=39 // pred_check_branch
          %259 = sbr.rel (%p257) target = $region52
        $region51: #{tpu_custom_call.1} parent=39 // pred_region
          %260 = dma.done [#allocation6], 128
        $region52: #{tpu_custom_call.1} parent=39 // pred_fallthru
          _
        // Predicated region
        $region53: #{tpu_custom_call.1} parent=39 // pred_check
          %p261 = pneg %p108
        $region54: #{tpu_custom_call.1} parent=39 // pred_check_branch
          %263 = sbr.rel (%p261) target = $region56
        $region55: #{tpu_custom_call.1} parent=39 // pred_region
          %264 = dma.done [#allocation9], 128
        $region56: #{tpu_custom_call.1} parent=39 // pred_fallthru
          _
        // Predicated region
        $region57: #{tpu_custom_call.1} parent=39 // pred_check
          %p265 = pneg %p129
        $region58: #{tpu_custom_call.1} parent=39 // pred_check_branch
          %267 = sbr.rel (%p265) target = $region60
        $region59: #{tpu_custom_call.1} parent=39 // pred_region
          %268 = dma.done [#allocation9], 128
        $region60: #{tpu_custom_call.1} parent=39 // pred_fallthru
          _
        %s269 = sand.u32 %s32, 1
        %s270 = scalar_lea.sflag [#allocation3], %s269
        %s271 = sand.u32 %s32, 1
        %s272 = smul.addr %s271, 16
        %s273 = scalar_lea.vmem [#allocation2], %s272
        %p274 = pneg %p45
        %p275 = pneg %p42
        %p276 = pneg %p66
        %p277 = pneg %p63
        %p278 = pneg %p87
        %p279 = pneg %p84
        %p280 = pneg %p108
        %p281 = pneg %p105
        %p282 = pneg %p129
        %p283 = pneg %p126
        %p284 = pneg %p155
        %p285 = pneg %p152
        %s286 = sand.u32 %s142, 1
        %s287 = scalar_lea.sflag [#allocation4], %s286
        %s288 = sand.u32 %s142, 1
        %s289 = smul.addr %s288, 16
        %s290 = scalar_lea.vmem [#allocation11], %s289
        %v291 = vld [vmem:[%s248] sm:$0xff]
        %v292 = vld [vmem:[%s248 + $0x8] sm:$0xff]
        %v293 = vld [vmem:[#allocation5] sm:$0xff]
        %v294 = vld [vmem:[#allocation7] sm:$0xff]
        %v295 = vld [vmem:[#allocation8] sm:$0xff]
        %v296 = vld [vmem:[#allocation10] sm:$0xff]
        %v297 = vlaneseq
        %v298 = vand.u32 %v297, 127
        %v299 = vadd.s32 %v298, 128
        %300 = vrot.lane.b32.xlu0 %v291, 2
        %v301 = vpop.permute.xlu0 %300
        %302 = vrot.lane.b32.xlu0 %v292, 2
        %v303 = vpop.permute.xlu0 %302
        %vm304 = vcmp.lt.s32.totalorder %v298, 2
        %v305 = vsel %vm304, %v301, %v303
        %v306 = vsel %vm304, %v303, %v301
        %vm307 = vcmp.ge.s32.totalorder %v298, 2
        %vm308 = vcmp.ge.s32.totalorder %v299, 2
        %v309 = vsel %vm307, 1, 0
        %v310 = vsel %vm308, 1, 0
        %vm311 = vcmp.eq.s32.totalorder %v309, 1
        %vm312 = vcmp.eq.s32.totalorder %v310, 1
        %314 = vset.pattern.permute.xlu0 0
        %315 = vperm.xlu0 %314, %v293
        %v316 = vpop.permute.xlu0 %315
        %v318 = vsel %vm311, %v316, 0.0
        %v319 = vsel %vm312, %v316, 0.0
        %v320 = vmul.f32 %v318, %v306
        %v321 = vmul.f32 %v319, %v305
        %322 = vrot.lane.b32.xlu0 %v291, 1
        %v323 = vpop.permute.xlu0 %322
        %324 = vrot.lane.b32.xlu0 %v292, 1
        %v325 = vpop.permute.xlu0 %324
        %vm326 = vcmp.lt.s32.totalorder %v298, 1
        %v327 = vsel %vm326, %v323, %v325
        %v328 = vsel %vm326, %v325, %v323
        %vm329 = vcmp.ge.s32.totalorder %v298, 1
        %vm330 = vcmp.ge.s32.totalorder %v299, 1
        %v331 = vsel %vm329, 1, 0
        %v332 = vsel %vm330, 1, 0
        %vm333 = vcmp.eq.s32.totalorder %v331, 1
        %vm334 = vcmp.eq.s32.totalorder %v332, 1
        %335 = vset.pattern.permute.xlu0 1
        %336 = vperm.xlu0 %335, %v293
        %v337 = vpop.permute.xlu0 %336
        %v339 = vsel %vm333, %v337, 0.0
        %v340 = vsel %vm334, %v337, 0.0
        %v341 = vmul.f32 %v339, %v328
        %v342 = vmul.f32 %v340, %v327
        %v343 = vadd.f32 %v320, %v341
        %v344 = vadd.f32 %v321, %v342
        %345 = vset.pattern.permute.xlu0 2
        %346 = vperm.xlu0 %345, %v293
        %v347 = vpop.permute.xlu0 %346
        %v349 = vmul.f32 %v347, %v291
        %v350 = vmul.f32 %v347, %v292
        %v351 = vadd.f32 %v343, %v349
        %v352 = vadd.f32 %v344, %v350
        %353 = vrot.lane.b32.xlu0 %v291, 127
        %v354 = vpop.permute.xlu0 %353
        %355 = vrot.lane.b32.xlu0 %v292, 127
        %v356 = vpop.permute.xlu0 %355
        %vm357 = vcmp.lt.s32.totalorder %v298, 127
        %v358 = vsel %vm357, %v354, %v356
        %v359 = vsel %vm357, %v356, %v354
        %vm360 = vcmp.lt.s32.totalorder %v298, 255
        %vm361 = vcmp.lt.s32.totalorder %v299, 255
        %v362 = vsel %vm360, 1, 0
        %v363 = vsel %vm361, 1, 0
        %vm364 = vcmp.eq.s32.totalorder %v362, 1
        %vm365 = vcmp.eq.s32.totalorder %v363, 1
        %366 = vset.pattern.permute.xlu0 3
        %367 = vperm.xlu0 %366, %v293
        %v368 = vpop.permute.xlu0 %367
        %v370 = vsel %vm364, %v368, 0.0
        %v371 = vsel %vm365, %v368, 0.0
        %v372 = vmul.f32 %v370, %v358
        %v373 = vmul.f32 %v371, %v359
        %v374 = vadd.f32 %v351, %v372
        %v375 = vadd.f32 %v352, %v373
        %376 = vrot.lane.b32.xlu0 %v291, 126
        %v377 = vpop.permute.xlu0 %376
        %378 = vrot.lane.b32.xlu0 %v292, 126
        %v379 = vpop.permute.xlu0 %378
        %vm380 = vcmp.lt.s32.totalorder %v298, 126
        %v381 = vsel %vm380, %v377, %v379
        %v382 = vsel %vm380, %v379, %v377
        %vm383 = vcmp.lt.s32.totalorder %v298, 254
        %vm384 = vcmp.lt.s32.totalorder %v299, 254
        %v385 = vsel %vm383, 1, 0
        %v386 = vsel %vm384, 1, 0
        %vm387 = vcmp.eq.s32.totalorder %v385, 1
        %vm388 = vcmp.eq.s32.totalorder %v386, 1
        %389 = vset.pattern.permute.xlu0 4
        %390 = vperm.xlu0 %389, %v293
        %v391 = vpop.permute.xlu0 %390
        %v393 = vsel %vm387, %v391, 0.0
        %v394 = vsel %vm388, %v391, 0.0
        %v395 = vmul.f32 %v393, %v381
        %v396 = vmul.f32 %v394, %v382
        %v397 = vadd.f32 %v374, %v395
        %v398 = vadd.f32 %v375, %v396
        %400 = vset.pattern.permute.xlu0 0
        %401 = vperm.xlu0 %400, %v296
        %v402 = vpop.permute.xlu0 %401
        %v404 = vadd.f32 %v397, %v402
        %v405 = vadd.f32 %v398, %v402
        %v406 = vmax.f32 %v404, 0.0
        %v407 = vmax.f32 %v405, 0.0
        %408 = vrot.lane.b32.xlu0 %v406, 9
        %v409 = vpop.permute.xlu0 %408
        %410 = vrot.lane.b32.xlu0 %v407, 9
        %v411 = vpop.permute.xlu0 %410
        %vm412 = vcmp.lt.s32.totalorder %v298, 9
        %v413 = vsel %vm412, %v409, %v411
        %v414 = vsel %vm412, %v411, %v409
        %vm415 = vcmp.ge.s32.totalorder %v298, 9
        %vm416 = vcmp.ge.s32.totalorder %v299, 9
        %v417 = vsel %vm415, 1, 0
        %v418 = vsel %vm416, 1, 0
        %vm419 = vcmp.eq.s32.totalorder %v417, 1
        %vm420 = vcmp.eq.s32.totalorder %v418, 1
        %422 = vset.pattern.permute.xlu0 0
        %423 = vperm.xlu0 %422, %v294
        %v424 = vpop.permute.xlu0 %423
        %v426 = vsel %vm419, %v424, 0.0
        %v427 = vsel %vm420, %v424, 0.0
        %v428 = vmul.f32 %v426, %v414
        %v429 = vmul.f32 %v427, %v413
        %430 = vrot.lane.b32.xlu0 %v406, 6
        %v431 = vpop.permute.xlu0 %430
        %432 = vrot.lane.b32.xlu0 %v407, 6
        %v433 = vpop.permute.xlu0 %432
        %vm434 = vcmp.lt.s32.totalorder %v298, 6
        %v435 = vsel %vm434, %v431, %v433
        %v436 = vsel %vm434, %v433, %v431
        %vm437 = vcmp.ge.s32.totalorder %v298, 6
        %vm438 = vcmp.ge.s32.totalorder %v299, 6
        %v439 = vsel %vm437, 1, 0
        %v440 = vsel %vm438, 1, 0
        %vm441 = vcmp.eq.s32.totalorder %v439, 1
        %vm442 = vcmp.eq.s32.totalorder %v440, 1
        %443 = vset.pattern.permute.xlu0 1
        %444 = vperm.xlu0 %443, %v294
        %v445 = vpop.permute.xlu0 %444
        %v447 = vsel %vm441, %v445, 0.0
        %v448 = vsel %vm442, %v445, 0.0
        %v449 = vmul.f32 %v447, %v436
        %v450 = vmul.f32 %v448, %v435
        %v451 = vadd.f32 %v428, %v449
        %v452 = vadd.f32 %v429, %v450
        %453 = vrot.lane.b32.xlu0 %v406, 3
        %v454 = vpop.permute.xlu0 %453
        %455 = vrot.lane.b32.xlu0 %v407, 3
        %v456 = vpop.permute.xlu0 %455
        %vm457 = vcmp.lt.s32.totalorder %v298, 3
        %v458 = vsel %vm457, %v454, %v456
        %v459 = vsel %vm457, %v456, %v454
        %vm460 = vcmp.ge.s32.totalorder %v298, 3
        %vm461 = vcmp.ge.s32.totalorder %v299, 3
        %v462 = vsel %vm460, 1, 0
        %v463 = vsel %vm461, 1, 0
        %vm464 = vcmp.eq.s32.totalorder %v462, 1
        %vm465 = vcmp.eq.s32.totalorder %v463, 1
        %466 = vset.pattern.permute.xlu0 2
        %467 = vperm.xlu0 %466, %v294
        %v468 = vpop.permute.xlu0 %467
        %v470 = vsel %vm464, %v468, 0.0
        %v471 = vsel %vm465, %v468, 0.0
        %v472 = vmul.f32 %v470, %v459
        %v473 = vmul.f32 %v471, %v458
        %v474 = vadd.f32 %v451, %v472
        %v475 = vadd.f32 %v452, %v473
        %476 = vset.pattern.permute.xlu0 3
        %477 = vperm.xlu0 %476, %v294
        %v478 = vpop.permute.xlu0 %477
        %v480 = vmul.f32 %v478, %v406
        %v481 = vmul.f32 %v478, %v407
        %v482 = vadd.f32 %v474, %v480
        %v483 = vadd.f32 %v475, %v481
        %484 = vrot.lane.b32.xlu0 %v406, 125
        %v485 = vpop.permute.xlu0 %484
        %486 = vrot.lane.b32.xlu0 %v407, 125
        %v487 = vpop.permute.xlu0 %486
        %vm488 = vcmp.lt.s32.totalorder %v298, 125
        %v489 = vsel %vm488, %v485, %v487
        %v490 = vsel %vm488, %v487, %v485
        %vm491 = vcmp.lt.s32.totalorder %v298, 253
        %vm492 = vcmp.lt.s32.totalorder %v299, 253
        %v493 = vsel %vm491, 1, 0
        %v494 = vsel %vm492, 1, 0
        %vm495 = vcmp.eq.s32.totalorder %v493, 1
        %vm496 = vcmp.eq.s32.totalorder %v494, 1
        %497 = vset.pattern.permute.xlu0 4
        %498 = vperm.xlu0 %497, %v294
        %v499 = vpop.permute.xlu0 %498
        %v501 = vsel %vm495, %v499, 0.0
        %v502 = vsel %vm496, %v499, 0.0
        %v503 = vmul.f32 %v501, %v489
        %v504 = vmul.f32 %v502, %v490
        %v505 = vadd.f32 %v482, %v503
        %v506 = vadd.f32 %v483, %v504
        %507 = vrot.lane.b32.xlu0 %v406, 122
        %v508 = vpop.permute.xlu0 %507
        %509 = vrot.lane.b32.xlu0 %v407, 122
        %v510 = vpop.permute.xlu0 %509
        %vm511 = vcmp.lt.s32.totalorder %v298, 122
        %v512 = vsel %vm511, %v508, %v510
        %v513 = vsel %vm511, %v510, %v508
        %vm514 = vcmp.lt.s32.totalorder %v298, 250
        %vm515 = vcmp.lt.s32.totalorder %v299, 250
        %v516 = vsel %vm514, 1, 0
        %v517 = vsel %vm515, 1, 0
        %vm518 = vcmp.eq.s32.totalorder %v516, 1
        %vm519 = vcmp.eq.s32.totalorder %v517, 1
        %520 = vset.pattern.permute.xlu0 5
        %521 = vperm.xlu0 %520, %v294
        %v522 = vpop.permute.xlu0 %521
        %v524 = vsel %vm518, %v522, 0.0
        %v525 = vsel %vm519, %v522, 0.0
        %v526 = vmul.f32 %v524, %v512
        %v527 = vmul.f32 %v525, %v513
        %v528 = vadd.f32 %v505, %v526
        %v529 = vadd.f32 %v506, %v527
        %530 = vrot.lane.b32.xlu0 %v406, 119
        %v531 = vpop.permute.xlu0 %530
        %532 = vrot.lane.b32.xlu0 %v407, 119
        %v533 = vpop.permute.xlu0 %532
        %vm534 = vcmp.lt.s32.totalorder %v298, 119
        %v535 = vsel %vm534, %v531, %v533
        %v536 = vsel %vm534, %v533, %v531
        %vm537 = vcmp.lt.s32.totalorder %v298, 247
        %vm538 = vcmp.lt.s32.totalorder %v299, 247
        %v539 = vsel %vm537, 1, 0
        %v540 = vsel %vm538, 1, 0
        %vm541 = vcmp.eq.s32.totalorder %v539, 1
        %vm542 = vcmp.eq.s32.totalorder %v540, 1
        %543 = vset.pattern.permute.xlu0 6
        %544 = vperm.xlu0 %543, %v294
        %v545 = vpop.permute.xlu0 %544
        %v547 = vsel %vm541, %v545, 0.0
        %v548 = vsel %vm542, %v545, 0.0
        %v549 = vmul.f32 %v547, %v535
        %v550 = vmul.f32 %v548, %v536
        %v551 = vadd.f32 %v528, %v549
        %v552 = vadd.f32 %v529, %v550
        %553 = vset.pattern.permute.xlu0 1
        %554 = vperm.xlu0 %553, %v296
        %v555 = vpop.permute.xlu0 %554
        %v557 = vadd.f32 %v551, %v555
        %v558 = vadd.f32 %v552, %v555
        %v559 = vmax.f32 %v557, 0.0
        %v560 = vmax.f32 %v558, 0.0
        %561 = vset.pattern.permute.xlu0 2
        %562 = vperm.xlu0 %561, %v296
        %v563 = vpop.permute.xlu0 %562
        %vm565 = vcmask 64512
        %v567 = vsel %vm565, %v295, 0
        %569 = vmatprep.subr.mxu0 %v560
        %570 = vmatpush1.msra.mxu0 %v559
        %571 = vmatprep.subr.mxu0 0.0
        %572 = vmatpush1.msra.mxu0 0.0
        %573 = vmatprep.subr.mxu0 0.0
        %574 = vmatpush1.msra.mxu0 0.0
        %575 = vmatprep.subr.mxu0 0.0
        %576 = vmatpush1.msra.mxu0 0.0
        %577 = vmatprep.subr.mxu0 0.0
        %578 = vmatpush1.msra.mxu0 0.0
        %579 = vmatprep.subr.mxu0 0.0
        %580 = vmatpush1.msra.mxu0 0.0
        %581 = vmatprep.subr.mxu0 0.0
        %582 = vmatpush1.msra.mxu0 0.0
        %583 = vmatprep.subr.mxu0 0.0
        %584 = vmatpush1.msra.mxu0 0.0
        %585 = vmatprep.subr.mxu0 0.0
        %586 = vmatpush1.msra.mxu0 0.0
        %587 = vmatprep.subr.mxu0 0.0
        %588 = vmatpush1.msra.mxu0 0.0
        %589 = vmatprep.subr.mxu0 0.0
        %590 = vmatpush1.msra.mxu0 0.0
        %591 = vmatprep.subr.mxu0 0.0
        %592 = vmatpush1.msra.mxu0 0.0
        %593 = vmatprep.subr.mxu0 0.0
        %594 = vmatpush1.msra.mxu0 0.0
        %595 = vmatprep.subr.mxu0 0.0
        %596 = vmatpush1.msra.mxu0 0.0
        %597 = vmatprep.subr.mxu0 0.0
        %598 = vmatpush1.msra.mxu0 0.0
        %599 = vmatprep.subr.mxu0 0.0
        %600 = vmatpush1.msra.mxu0 0.0
        %601 = vmatprep.subr.mxu0 0.0
        %602 = vmatpush1.msra.mxu0 0.0
        %603 = vmatprep.subr.mxu0 0.0
        %604 = vmatpush1.msra.mxu0 0.0
        %605 = vmatprep.subr.mxu0 0.0
        %606 = vmatpush1.msra.mxu0 0.0
        %607 = vmatprep.subr.mxu0 0.0
        %608 = vmatpush1.msra.mxu0 0.0
        %609 = vmatprep.subr.mxu0 0.0
        %610 = vmatpush1.msra.mxu0 0.0
        %611 = vmatprep.subr.mxu0 0.0
        %612 = vmatpush1.msra.mxu0 0.0
        %613 = vmatprep.subr.mxu0 0.0
        %614 = vmatpush1.msra.mxu0 0.0
        %615 = vmatprep.subr.mxu0 0.0
        %616 = vmatpush1.msra.mxu0 0.0
        %617 = vmatprep.subr.mxu0 0.0
        %618 = vmatpush1.msra.mxu0 0.0
        %619 = vmatprep.subr.mxu0 0.0
        %620 = vmatpush1.msra.mxu0 0.0
        %621 = vmatprep.subr.mxu0 0.0
        %622 = vmatpush1.msra.mxu0 0.0
        %623 = vmatprep.subr.mxu0 0.0
        %624 = vmatpush1.msra.mxu0 0.0
        %625 = vmatprep.subr.mxu0 0.0
        %626 = vmatpush1.msra.mxu0 0.0
        %627 = vmatprep.subr.mxu0 0.0
        %628 = vmatpush1.msra.mxu0 0.0
        %629 = vmatprep.subr.mxu0 0.0
        %630 = vmatpush1.msra.mxu0 0.0
        %631 = vmatprep.subr.mxu0 0.0
        %632 = vmatpush1.msra.mxu0 0.0
        %633 = vmatprep.mubr.f32.mxu0 0.0
        %634 = vmatmul.mubr.f32.gmra.mrb[0].mxu0 %v567
        %v635 = vpop.f32.mrb[0].mxu0
        %v636 = vadd.f32 %v563, %v635
        %v637 = vpop.f32.mrb[0].mxu0
        %v638 = vadd.f32 %v563, %v637
        %639 = vdwg.mxu0
        %v640 = vmax.f32 %v636, 0.0
        %v641 = vmax.f32 %v638, 0.0
        %v642 = vmul.f32 %v640, %v291
        %v643 = vmul.f32 %v641, %v292
        %644 = vset.pattern.permute.xlu0 3
        %645 = vperm.xlu0 %644, %v296
        %v646 = vpop.permute.xlu0 %645
        %v648 = vmul.f32 %v642, %v646
        %v649 = vmul.f32 %v643, %v646
        %650 = vset.pattern.permute.xlu0 4
        %651 = vperm.xlu0 %650, %v296
        %v652 = vpop.permute.xlu0 %651
        %v654 = vadd.f32 %v648, %v652
        %v655 = vadd.f32 %v649, %v652
        %v656 = vmax.f32 %v654, 0.0
        %v657 = vmax.f32 %v655, 0.0
        %658 = vst [vmem:[%s290] sm:$0xff] %v656
        %659 = vst [vmem:[%s290 + $0x8] sm:$0xff] %v657
        %s660 = sand.u32 %s142, 1
        %s661 = scalar_lea.sflag [#allocation4], %s660
        %s662 = sand.u32 %s142, 1
        %s663 = smul.addr %s662, 16
        %s664 = scalar_lea.vmem [#allocation11], %s663
        // Predicated region
        $region61: #{tpu_custom_call.1} parent=39 // pred_check
          %p665 = pneg %p152
        $region62: #{tpu_custom_call.1} parent=39 // pred_check_branch
          %667 = sbr.rel (%p665) target = $region64
        $region63: #{tpu_custom_call.1} parent=39 // pred_region
          %s669 = ssub.s32 256, 256
          %670 = vsyncadd %s661, %s669
          %s671 = smul.addr %s24, 2
          %s672 = smul.addr %s671, 128
          %s673 = scalar_lea.hbm %s5, %s672
          %s675 = sshll.u32 %s664, 4
          %s676 = int_to_ptr.vmem [resolvable:$true] %s675
          %678 = dma.vmem_to_hbm [thread:$0]  %s676, 256, %s673, %s661
        $region64: #{tpu_custom_call.1} parent=39 // pred_fallthru
          _
      $region40: #{tpu_custom_call.1} parent=5 // pred_fallthru
        _
      %p679 = scmp.le.s32.totalorder 2, %s19
      // Predicated region
      $region65: #{tpu_custom_call.1} parent=5 // pred_check
        %p680 = pneg %p679
      $region66: #{tpu_custom_call.1} parent=5 // pred_check_branch
        %682 = sbr.rel (%p680) target = $region68
      $region67: #{tpu_custom_call.1} parent=5 // pred_region
        %s683 = ssub.s32 %s19, 2
        // Predicated region
        $region69: #{tpu_custom_call.1} parent=67 // pred_check
          %p684 = pneg %p158
        $region70: #{tpu_custom_call.1} parent=67 // pred_check_branch
          %686 = sbr.rel (%p684) target = $region72
        $region71: #{tpu_custom_call.1} parent=67 // pred_region
          %s687 = sand.u32 %s143, 1
          %s688 = scalar_lea.sflag [#allocation4], %s687
          %s689 = sand.u32 %s143, 1
          %s690 = smul.addr %s689, 16
          %s691 = scalar_lea.vmem [#allocation11], %s690
          %692 = dma.done %s688, 256
        $region72: #{tpu_custom_call.1} parent=67 // pred_fallthru
          _
      $region68: #{tpu_custom_call.1} parent=5 // pred_fallthru
        _
    $region6: #{tpu_custom_call.1} parent=1 // loop_footer
      %s23 = sadd.s32 1, %s19
    $region7: #{tpu_custom_call.1} parent=1 // loop_footer_branch
      %18 = sbr.rel target = $region3
    $region8: #{tpu_custom_call.1} parent=1 // loop_exit
      _
    %693 = vsyncpa [#allocation3], 1
    %s694 = scalar_lea.sflag [#allocation3], 1
    %695 = vsyncpa %s694, 1
    %696 = vsyncpa [#allocation6], 1
    %697 = vsyncpa [#allocation9], 1
    %698 = vsyncpa [#allocation4], 1
    %s699 = scalar_lea.sflag [#allocation4], 1
    %700 = vsyncpa %s699, 1

</llo_original>
